<compile_context>
chip_gen: v6e
topology: v6e:2x2x1
jax: 0.10.0
libtpu: 0.0.40
codegen_flags: <defaults>
</compile_context>

<pallas_src>
import functools

import jax
import jax.numpy as jnp
from jax.experimental import pallas as pl
from jax.experimental.pallas import tpu as pltpu


def _round_up(x, m):
    return ((x + m - 1) // m) * m


# --------------------------------------------------------------------------
# Capability / hardware probes (run once, outside jit).
# --------------------------------------------------------------------------
def _tpu_vmem_capacity_bytes():
    try:
        return int(pltpu.get_tpu_info().vmem_capacity_bytes)
    except Exception:
        return 64 << 20  # conservative fallback (v7x per-core VMEM)


def _probe_copy_kernel(x_ref, o_ref):
    o_ref[...] = x_ref[...]


@functools.lru_cache(maxsize=1)
def _pipeline_mode_supported():
    """Probe whether BlockSpec(pipeline_mode=pl.Buffered(1)) works here."""
    try:
        out = pl.pallas_call(
            _probe_copy_kernel,
            out_shape=jax.ShapeDtypeStruct((8, 128), jnp.float32),
            grid=(2,),
            in_specs=[pl.BlockSpec((8, 128), lambda i: (0, 0),
                                   pipeline_mode=pl.Buffered(1))],
            out_specs=pl.BlockSpec((8, 128), lambda i: (0, 0)),
        )(jnp.ones((8, 128), jnp.float32))
        jax.block_until_ready(out)
        return bool(jnp.all(out == 1.0))
    except Exception:
        return False


# --------------------------------------------------------------------------
# Kernel
# --------------------------------------------------------------------------
def _bpnet_kernel(x_ref, w1_ref, b1_ref, w2_ref, b2_ref, o_ref, acc_ref):
    """Fused MLP hot path, tiled over (batch, hidden):
       acc += relu(x @ W1[:, k] + b1[k]) @ W2[k, :];  y = acc + b2."""
    k = pl.program_id(1)

    @pl.when(k == 0)
    def _init():
        acc_ref[...] = jnp.zeros_like(acc_ref)

    # Cast x to the weight dtype inside the kernel (bf16 path keeps x f32 in
    # HBM: no extra activation pass, half the MXU operand width).
    x = x_ref[...].astype(w1_ref.dtype)
    h = jnp.dot(x, w1_ref[...], preferred_element_type=jnp.float32)
    h = jnp.maximum(h + b1_ref[...].astype(jnp.float32), 0.0)   # f32 ReLU (VPU)
    acc_ref[...] += jnp.dot(h.astype(w2_ref.dtype), w2_ref[...],
                            preferred_element_type=jnp.float32)

    @pl.when(k == pl.num_programs(1) - 1)
    def _finalize():
        o_ref[...] = (acc_ref[...] + b2_ref[...].astype(jnp.float32)
                      ).astype(o_ref.dtype)


# --------------------------------------------------------------------------
# Forward (weights arrive already lane-padded; all planning is trace-time).
# --------------------------------------------------------------------------
@functools.partial(
    jax.jit,
    static_argnames=("in_num", "out_num", "block_m_hint", "single_buffer_ok",
                     "vmem_budget", "vmem_limit"))
def _bpnet_forward_padded(x, w1_p, b1_p, w2_p, b2_p, *, in_num, out_num,
                          block_m_hint, single_buffer_ok, vmem_budget,
                          vmem_limit):
    batch = x.shape[0]
    in_p, hid_p = w1_p.shape
    out_p = w2_p.shape[1]
    out_dtype = jnp.result_type(x.dtype, w2_p.dtype)

    x_isz = x.dtype.itemsize
    op_isz = w1_p.dtype.itemsize           # MXU operand (weight) dtype
    out_isz = jnp.dtype(out_dtype).itemsize
    b_isz = b1_p.dtype.itemsize

    # block_m alignment is driven by the dtypes of the block-spec'd arrays
    # whose second-minor dim is block_m (x and the output).
    m_align = 16 if min(x_isz, out_isz) < 4 else 8
    m_max = _round_up(batch, m_align)

    def est(bm, bh):
        """Conservative VMEM estimate: block buffers + scratch + intermediates."""
        nk = hid_p // bh
        w_buf = 1 if (nk == 1 and single_buffer_ok) else 2
        b2_buf = 1 if single_buffer_ok else 2
        weights = w_buf * (in_p * bh + bh * out_p) * op_isz
        biases = w_buf * bh * b_isz + b2_buf * out_p * b_isz
        acts = 2 * bm * in_p * x_isz + 2 * bm * out_p * out_isz
        acc = bm * out_p * 4                                   # f32 accumulator
        # Materialized intermediates: x cast, h (f32) + h cast, y (f32).
        inter = bm * in_p * op_isz + bm * bh * (4 + op_isz) + bm * out_p * 4
        return weights + biases + acts + acc + inter

    # ---- block_h: keep weights fully resident if possible; otherwise K-tile
    #      the hidden dim (candidates are 128-multiples dividing hid_p so no
    #      garbage weight rows/cols are ever read).
    m_pref = min(m_max, max(m_align, 256))
    block_h = None
    for bh in range(hid_p, 0, -128):
        if hid_p % bh != 0:
            continue
        if est(m_pref, bh) <= vmem_budget:
            block_h = bh
            break
    if block_h is None:
        block_h = 128
        # TODO(synk): also tile in_p / out_p for extremely wide in/out layers.

    # ---- block_m: largest aligned tile (<= hint, <= padded batch) that fits.
    bm = max(m_align, (min(int(block_m_hint), m_max) // m_align) * m_align)
    while est(bm, block_h) > vmem_budget and bm > m_align:
        bm = max(m_align, ((bm // 2) // m_align) * m_align)

    # ---- v7x megacore: ensure the "parallel" batch axis has >= 2 tiles (and
    #      prefer an even count) so both TensorCores get balanced work.
    num_m = pl.cdiv(batch, bm)
    while num_m == 1 and bm >= 2 * m_align and batch > m_align:
        bm = max(m_align, ((bm // 2) // m_align) * m_align)
        num_m = pl.cdiv(batch, bm)
    if 1 < num_m <= 7 and num_m % 2 == 1 and bm >= 2 * m_align:
        bm_half = max(m_align, ((bm // 2) // m_align) * m_align)
        if pl.cdiv(batch, bm_half) % 2 == 0:
            bm = bm_half
            num_m = pl.cdiv(batch, bm)

    num_k = hid_p // block_h
    grid = (num_m, num_k)

    # ---- x: zero-pad lanes only when needed (padded lanes must be zero so
    #      NaN/Inf garbage cannot leak through the zero W1 rows).  The batch
    #      axis is never padded; a ragged last tile gets a masked store.
    if in_num != in_p:
        x = jnp.pad(x, ((0, 0), (0, in_p - in_num)))

    def _spec(shape, index_map, *, constant=False):
        if constant and single_buffer_ok:
            # Constant index map -> single buffer (no useless double-buffer).
            return pl.BlockSpec(shape, index_map, pipeline_mode=pl.Buffered(1))
        return pl.BlockSpec(shape, index_map)

    resident = num_k == 1
    in_specs = [
        # x tile (streamed; default pipeline depth).
        pl.BlockSpec((bm, in_p), lambda i, k: (i, 0)),
        _spec((in_p, block_h), lambda i, k: (0, k), constant=resident),  # W1
        _spec((1, block_h), lambda i, k: (0, k), constant=resident),     # b1
        _spec((block_h, out_p), lambda i, k: (k, 0), constant=resident), # W2
        _spec((1, out_p), lambda i, k: (0, 0), constant=True),           # b2
    ]

    cost = pl.CostEstimate(
        flops=2 * batch * (in_p * hid_p + hid_p * out_p),
        transcendentals=0,
        bytes_accessed=(x.size * x_isz
                        + (w1_p.size + w2_p.size) * op_isz
                        + (b1_p.size + b2_p.size) * b_isz
                        + batch * out_p * out_isz),
    )

    out_padded = pl.pallas_call(
        _bpnet_kernel,
        out_shape=jax.ShapeDtypeStruct((batch, out_p), out_dtype),
        grid_spec=pltpu.PrefetchScalarGridSpec(
            num_scalar_prefetch=0,
            grid=grid,
            in_specs=in_specs,
            out_specs=pl.BlockSpec((bm, out_p), lambda i, k: (i, 0)),
            scratch_shapes=[pltpu.VMEM((bm, out_p), jnp.float32)],
        ),
        compiler_params=pltpu.CompilerParams(
            dimension_semantics=("parallel", "arbitrary"),
            vmem_limit_bytes=vmem_limit,
        ),
        cost_estimate=cost,
    )(x, w1_p, b1_p, w2_p, b2_p)

    if out_num != out_p:
        return out_padded[:, :out_num]
    return out_padded


# --------------------------------------------------------------------------
# Module wrapper: pad / cast weights ONCE, reuse across forwards.
# --------------------------------------------------------------------------
class BPNetPallas:
    """Pallas TPU BPNet: Linear -> ReLU -> Linear.

    w1: (in_num, hidden_num), b1: (hidden_num,) or (1, hidden_num)
    w2: (hidden_num, out_num), b2: (out_num,)  or (1, out_num)
    matmul_dtype=jnp.bfloat16 enables bf16 MXU operands (f32 accumulation).
    """

    def __init__(self, w1, b1, w2, b2, *, matmul_dtype=None, block_m=512,
                 vmem_budget_bytes=None):
        in_num, hidden_num = w1.shape
        out_num = w2.shape[1]
        in_p = _round_up(in_num, 128)
        hid_p = _round_up(hidden_num, 128)
        out_p = _round_up(out_num, 128)

        wdt = matmul_dtype if matmul_dtype is not None else w1.dtype
        # Zero padding is numerically inert: ReLU(0)=0, zero weight rows/cols.
        self.w1 = jnp.pad(w1, ((0, in_p - in_num),
                               (0, hid_p - hidden_num))).astype(wdt)
        self.w2 = jnp.pad(w2, ((0, hid_p - hidden_num),
                               (0, out_p - out_num))).astype(wdt)
        self.b1 = jnp.pad(jnp.reshape(b1, (1, -1)),
                          ((0, 0), (0, hid_p - hidden_num)))
        self.b2 = jnp.pad(jnp.reshape(b2, (1, -1)),
                          ((0, 0), (0, out_p - out_num)))

        self.in_num = int(in_num)
        self.out_num = int(out_num)
        self._block_m = int(block_m)

        cap = _tpu_vmem_capacity_bytes()
        self._limit = min(int(cap * 0.9), 120 << 20)
        if vmem_budget_bytes is not None:
            self._budget = min(int(vmem_budget_bytes), self._limit)
        else:
            # ~46 MiB on v7x (64 MiB/core), ~92 MiB on v5e/v6e (128 MiB).
            self._budget = min(int(cap * 0.72), 100 << 20, self._limit)
        self._single_buf = _pipeline_mode_supported()

    def __call__(self, x):
        return _bpnet_forward_padded(
            x, self.w1, self.b1, self.w2, self.b2,
            in_num=self.in_num, out_num=self.out_num,
            block_m_hint=self._block_m,
            single_buffer_ok=self._single_buf,
            vmem_budget=self._budget, vmem_limit=self._limit)


def init_bpnet_params(key, in_num, hidden_num, out_num, dtype=jnp.float32):
    """Deterministic init mimicking nn.Linear's U(-1/sqrt(fan_in), 1/sqrt(fan_in))."""
    k1, k2, k3, k4 = jax.random.split(key, 4)
    lim1 = 1.0 / jnp.sqrt(in_num)
    lim2 = 1.0 / jnp.sqrt(hidden_num)
    w1 = jax.random.uniform(k1, (in_num, hidden_num), dtype, -lim1, lim1)
    b1 = jax.random.uniform(k2, (1, hidden_num), dtype, -lim1, lim1)
    w2 = jax.random.uniform(k3, (hidden_num, out_num), dtype, -lim2, lim2)
    b2 = jax.random.uniform(k4, (1, out_num), dtype, -lim2, lim2)
    return w1, b1, w2, b2


if __name__ == "__main__":
    key = jax.random.PRNGKey(0)
    k_x, k_p, k_x2, k_p2 = jax.random.split(key, 4)

    # --- 1) Small config, exact f32 path (matches the PyTorch module). ---
    batch, in_num, hidden_num, out_num = 8, 16, 32, 4
    x = jax.random.normal(k_x, (batch, in_num), dtype=jnp.float32)
    w1, b1, w2, b2 = init_bpnet_params(k_p, in_num, hidden_num, out_num)

    net = BPNetPallas(w1, b1, w2, b2)
    out = net(x)
    jax.block_until_ready(out)

    ref = jnp.maximum(x @ w1 + b1, 0.0) @ w2 + b2
    assert out.shape == (batch, out_num)
    assert jnp.allclose(out, ref, atol=1e-5, rtol=1e-5)

    # --- 2) Larger config: multi-tile batch, forced hidden (K) tiling, and the
    #        bf16-operand MXU path with f32 accumulation. ---
    batch2, in_num2, hidden2, out_num2 = 96, 96, 512, 24
    x2 = jax.random.normal(k_x2, (batch2, in_num2), dtype=jnp.float32)
    w1b, b1b, w2b, b2b = init_bpnet_params(k_p2, in_num2, hidden2, out_num2)

    net2 = BPNetPallas(w1b, b1b, w2b, b2b, matmul_dtype=jnp.bfloat16,
                       vmem_budget_bytes=600_000)  # force the K-tiling path
    y2 = net2(x2)
    jax.block_until_ready(y2)

    ref2 = jnp.maximum(x2 @ w1b + b1b, 0.0) @ w2b + b2b
    assert y2.shape == (batch2, out_num2)
    assert jnp.allclose(y2.astype(jnp.float32), ref2, atol=5e-2, rtol=5e-2)

    print("KERNEL_OK")
</pallas_src>

<mosaic_0001>
module attributes {stable_mosaic.version = 11 : i64} {
  func.func @_probe_copy_kernel(%arg0: i32, %arg1: memref<8x128xf32, #tpu.memory_space<vmem>>, %arg2: memref<8x128xf32, #tpu.memory_space<vmem>>) attributes {dimension_semantics = [#tpu.dimension_semantics<arbitrary>], iteration_bounds = array<i64: 2>, scalar_prefetch = 0 : i64, scratch_operands = 0 : i64, tpu.core_type = #tpu.core_type<tc>, window_params = [{pipeline_mode = #tpu.pipeline_mode<synchronous>, transform_indices = @transform_0, window_bounds = array<i64: 8, 128>}, {pipeline_mode = #tpu.pipeline_mode<synchronous>, transform_indices = @transform_1, window_bounds = array<i64: 8, 128>}]} {
    %c0 = arith.constant 0 : index
    %c0_0 = arith.constant 0 : index
    %0 = vector.load %arg1[%c0, %c0_0] : memref<8x128xf32, #tpu.memory_space<vmem>>, vector<8x128xf32>
    %c0_1 = arith.constant 0 : index
    %c0_2 = arith.constant 0 : index
    %1 = vector.load %arg2[%c0_1, %c0_2] : memref<8x128xf32, #tpu.memory_space<vmem>>, vector<8x128xf32>
    tpu.vector_store %arg2[%c0_1, %c0_2], %0 {strides = array<i32>} : memref<8x128xf32, #tpu.memory_space<vmem>>, vector<8x128xf32>,
    return
  }
  func.func @transform_0(%arg0: i32) -> (i32, i32) {
    %c0_i32 = arith.constant 0 : i32
    %c0_i32_0 = arith.constant 0 : i32
    %c0_i32_1 = arith.constant 0 : i32
    return %c0_i32, %c0_i32_0 : i32, i32
  }
  func.func @transform_1(%arg0: i32) -> (i32, i32) {
    %c0_i32 = arith.constant 0 : i32
    %c0_i32_0 = arith.constant 0 : i32
    %c0_i32_1 = arith.constant 0 : i32
    return %c0_i32, %c0_i32_0 : i32, i32
  }
}

module attributes {stable_mosaic.version = 11 : i64} {
  func.func @_bpnet_kernel(%arg0: i32, %arg1: i32, %arg2: memref<8x128xf32, #tpu.memory_space<vmem>>, %arg3: memref<128x128xf32, #tpu.memory_space<vmem>>, %arg4: memref<1x128xf32, #tpu.memory_space<vmem>>, %arg5: memref<128x128xf32, #tpu.memory_space<vmem>>, %arg6: memref<1x128xf32, #tpu.memory_space<vmem>>, %arg7: memref<8x128xf32, #tpu.memory_space<vmem>>, %arg8: memref<8x128xf32, #tpu.memory_space<vmem>>) attributes {dimension_semantics = [#tpu.dimension_semantics<parallel>, #tpu.dimension_semantics<arbitrary>], iteration_bounds = array<i64: 1, 1>, scalar_prefetch = 0 : i64, scratch_operands = 1 : i64, tpu.core_type = #tpu.core_type<tc>, window_params = [{transform_indices = @transform_0, window_bounds = array<i64: 8, 128>}, {transform_indices = @transform_1, window_bounds = array<i64: 128, 128>}, {transform_indices = @transform_2, window_bounds = array<i64: 1, 128>}, {transform_indices = @transform_3, window_bounds = array<i64: 128, 128>}, {pipeline_mode = #tpu.pipeline_mode<synchronous>, transform_indices = @transform_4, window_bounds = array<i64: 1, 128>}, {transform_indices = @transform_5, window_bounds = array<i64: 8, 128>}]} {
    %c0_i32 = arith.constant 0 : i32
    %0 = arith.cmpi eq, %arg1, %c0_i32 : i32
    %1 = arith.extui %0 : i1 to i32
    %c0_i32_0 = arith.constant 0 : i32
    %2 = arith.cmpi ne, %1, %c0_i32_0 : i32
    scf.if %2 {
      %cst_16 = arith.constant 0.000000e+00 : f32
      %19 = vector.broadcast %cst_16 : f32 to vector<8x128xf32>
      %c0_17 = arith.constant 0 : index
      %c0_18 = arith.constant 0 : index
      %20 = vector.load %arg8[%c0_17, %c0_18] : memref<8x128xf32, #tpu.memory_space<vmem>>, vector<8x128xf32>
      tpu.vector_store %arg8[%c0_17, %c0_18], %19 {strides = array<i32>} : memref<8x128xf32, #tpu.memory_space<vmem>>, vector<8x128xf32>,
    } else {
    }
    %c0 = arith.constant 0 : index
    %c0_1 = arith.constant 0 : index
    %3 = vector.load %arg2[%c0, %c0_1] : memref<8x128xf32, #tpu.memory_space<vmem>>, vector<8x128xf32>
    %c0_2 = arith.constant 0 : index
    %c0_3 = arith.constant 0 : index
    %4 = vector.load %arg3[%c0_2, %c0_3] : memref<128x128xf32, #tpu.memory_space<vmem>>, vector<128x128xf32>
    %cst = arith.constant dense<0.000000e+00> : vector<8x128xf32>
    %5 = tpu.matmul %3, %4, %cst {dimension_numbers = #tpu.dot_dimension_numbers<[1], [0], [0], [1], [0, 0, 1, 1], [], []>} : vector<8x128xf32>, vector<128x128xf32>, vector<8x128xf32> -> vector<8x128xf32>
    %c0_4 = arith.constant 0 : index
    %c0_5 = arith.constant 0 : index
    %6 = vector.load %arg4[%c0_4, %c0_5] : memref<1x128xf32, #tpu.memory_space<vmem>>, vector<1x128xf32>
    %7 = vector.broadcast %6 : vector<1x128xf32> to vector<8x128xf32>
    %8 = arith.addf %5, %7 : vector<8x128xf32>
    %cst_6 = arith.constant 0.000000e+00 : f32
    %9 = vector.broadcast %cst_6 : f32 to vector<8x128xf32>
    %10 = arith.maximumf %8, %9 : vector<8x128xf32>
    %c0_7 = arith.constant 0 : index
    %c0_8 = arith.constant 0 : index
    %11 = vector.load %arg8[%c0_7, %c0_8] : memref<8x128xf32, #tpu.memory_space<vmem>>, vector<8x128xf32>
    %c0_9 = arith.constant 0 : index
    %c0_10 = arith.constant 0 : index
    %12 = vector.load %arg5[%c0_9, %c0_10] : memref<128x128xf32, #tpu.memory_space<vmem>>, vector<128x128xf32>
    %cst_11 = arith.constant dense<0.000000e+00> : vector<8x128xf32>
    %13 = tpu.matmul %10, %12, %cst_11 {dimension_numbers = #tpu.dot_dimension_numbers<[1], [0], [0], [1], [0, 0, 1, 1], [], []>} : vector<8x128xf32>, vector<128x128xf32>, vector<8x128xf32> -> vector<8x128xf32>
    %14 = arith.addf %11, %13 : vector<8x128xf32>
    %c0_12 = arith.constant 0 : index
    %c0_13 = arith.constant 0 : index
    %15 = vector.load %arg8[%c0_12, %c0_13] : memref<8x128xf32, #tpu.memory_space<vmem>>, vector<8x128xf32>
    tpu.vector_store %arg8[%c0_12, %c0_13], %14 {strides = array<i32>} : memref<8x128xf32, #tpu.memory_space<vmem>>, vector<8x128xf32>,
    %c0_i32_14 = arith.constant 0 : i32
    %16 = arith.cmpi eq, %arg1, %c0_i32_14 : i32
    %17 = arith.extui %16 : i1 to i32
    %c0_i32_15 = arith.constant 0 : i32
    %18 = arith.cmpi ne, %17, %c0_i32_15 : i32
    scf.if %18 {
      %c0_16 = arith.constant 0 : index
      %c0_17 = arith.constant 0 : index
      %19 = vector.load %arg8[%c0_16, %c0_17] : memref<8x128xf32, #tpu.memory_space<vmem>>, vector<8x128xf32>
      %c0_18 = arith.constant 0 : index
      %c0_19 = arith.constant 0 : index
      %20 = vector.load %arg6[%c0_18, %c0_19] : memref<1x128xf32, #tpu.memory_space<vmem>>, vector<1x128xf32>
      %21 = vector.broadcast %20 : vector<1x128xf32> to vector<8x128xf32>
      %22 = arith.addf %19, %21 : vector<8x128xf32>
      %c0_20 = arith.constant 0 : index
      %c0_21 = arith.constant 0 : index
      %23 = vector.load %arg7[%c0_20, %c0_21] : memref<8x128xf32, #tpu.memory_space<vmem>>, vector<8x128xf32>
      tpu.vector_store %arg7[%c0_20, %c0_21], %22 {strides = array<i32>} : memref<8x128xf32, #tpu.memory_space<vmem>>, vector<8x128xf32>,
    } else {
    }
    return
  }
  func.func @transform_0(%arg0: i32, %arg1: i32) -> (i32, i32) {
    %c0_i32 = arith.constant 0 : i32
    %c0_i32_0 = arith.constant 0 : i32
    return %arg0, %c0_i32 : i32, i32
  }
  func.func @transform_1(%arg0: i32, %arg1: i32) -> (i32, i32) {
    %c0_i32 = arith.constant 0 : i32
    %c0_i32_0 = arith.constant 0 : i32
    return %c0_i32, %arg1 : i32, i32
  }
  func.func @transform_2(%arg0: i32, %arg1: i32) -> (i32, i32) {
    %c0_i32 = arith.constant 0 : i32
    %c0_i32_0 = arith.constant 0 : i32
    return %c0_i32, %arg1 : i32, i32
  }
  func.func @transform_3(%arg0: i32, %arg1: i32) -> (i32, i32) {
    %c0_i32 = arith.constant 0 : i32
    %c0_i32_0 = arith.constant 0 : i32
    return %arg1, %c0_i32 : i32, i32
  }
  func.func @transform_4(%arg0: i32, %arg1: i32) -> (i32, i32) {
    %c0_i32 = arith.constant 0 : i32
    %c0_i32_0 = arith.constant 0 : i32
    %c0_i32_1 = arith.constant 0 : i32
    return %c0_i32, %c0_i32_0 : i32, i32
  }
  func.func @transform_5(%arg0: i32, %arg1: i32) -> (i32, i32) {
    %c0_i32 = arith.constant 0 : i32
    %c0_i32_0 = arith.constant 0 : i32
    return %arg0, %c0_i32 : i32, i32
  }
}

</mosaic_0001>

<llo_original>
// kernel: tpu_custom_call.1
$region0: #{tpu_custom_call.1}
  #allocation0 [shape = 'u32[]', space=smem, size = 0x4, offset = 0x4, fixed_abs, tag = 'smem constant byte address 0x4 - core index']
  #allocation1 [shape = 'u32[144,128]{1,0:T(1,128)}', space=vmem, size = 0x12000, scoped, tag = 'internal scratch']
  %s0 = inlined_call_operand.hbm [shape: f32[8,128], index: 0, kind: input, shape index: {}]
  %s1 = inlined_call_operand.hbm [shape: f32[8,128], index: 1, kind: output, shape index: {}]
  %s2 = sld [smem:[#allocation0]]
  $region41: #{tpu_custom_call.1} parent=0
    _
  %s4 = ssub.s32 1, %s2
  %s5 = scalar_select 0, %s4, %s2
  $region1: #{tpu_custom_call.1} parent=0
    #allocation2 [shape = 'u8[4096]{0}', space=vmem, size = 0x1000, scoped, tag = 'input window, operand 0, single buffered']
    #allocation3 [shape = 's32[2]{0}', space=sflag, size = 0x8, scoped, tag = 'scoped memory for tpu_custom_call.1']
    #allocation4 [shape = 's32[2]{0}', space=sflag, size = 0x8, scoped, tag = 'scoped memory for tpu_custom_call.1']
    #allocation5 [shape = 'u8[4096]{0}', space=vmem, size = 0x1000, scoped, tag = 'output window, operand 0, single buffered']
    %6 = vsyncpa [#allocation3], 0
    %7 = vsyncpa [#allocation4], 0
    loop: start=0, step=1, limit=4
    $region2: #{tpu_custom_call.1} parent=1 // loop_pre_header
      _
    $region3: #{tpu_custom_call.1} parent=1 // loop_header
      %s9 = sphi 0, %s13
      %p10 = scmp.ge.s32.totalorder %s9, 4
      %s17 = sphi 0, %s17
      %s19 = sphi 0, %s17
      %s20 = sphi 0, %s19
      %s34 = sphi 0, %s20
      %s38 = sphi 0, %s38
      %s40 = sphi 0, %s38
      %s41 = sphi 0, %s40
      %s55 = sphi 0, %s41
    $region4: #{tpu_custom_call.1} parent=1 // loop_header_branch
      %12 = sbr.rel (%p10) target = $region8
    $region5: #{tpu_custom_call.1} parent=1 // loop_body
      %s14 = ssub.s32 %s9, 1
      %s15 = ssub.s32 %s9, 2
      %s16 = sadd.s32 %s9, 1
      %s18 = sadd.s32 %s17, 1
      %p21 = scmp.eq.s32.totalorder %s9, 1
      %p22 = scmp.ne.s32.totalorder %s17, %s19
      %p23 = scmp.eq.s32.totalorder %s9, 0
      %p24 = por %p22, %p23
      %p25 = scmp.ne.s32.totalorder %s17, %s19
      %p26 = scmp.eq.s32.totalorder %s14, 1
      %p27 = por %p25, %p26
      %p28 = scmp.ne.s32.totalorder %s19, %s20
      %p29 = scmp.eq.s32.totalorder %s14, 0
      %p30 = por %p28, %p29
      %p31 = scmp.ne.s32.totalorder %s19, %s20
      %p32 = scmp.eq.s32.totalorder %s15, 1
      %p33 = por %p31, %p32
      %p35 = scmp.ne.s32.totalorder %s20, %s34
      %p36 = scmp.eq.s32.totalorder %s15, 0
      %p37 = por %p35, %p36
      %s39 = sadd.s32 %s38, 1
      %p42 = scmp.eq.s32.totalorder %s9, 1
      %p43 = scmp.ne.s32.totalorder %s38, %s40
      %p44 = scmp.eq.s32.totalorder %s9, 0
      %p45 = por %p43, %p44
      %p46 = scmp.ne.s32.totalorder %s38, %s40
      %p47 = scmp.eq.s32.totalorder %s14, 1
      %p48 = por %p46, %p47
      %p49 = scmp.ne.s32.totalorder %s40, %s41
      %p50 = scmp.eq.s32.totalorder %s14, 0
      %p51 = por %p49, %p50
      %p52 = scmp.ne.s32.totalorder %s40, %s41
      %p53 = scmp.eq.s32.totalorder %s15, 1
      %p54 = por %p52, %p53
      %p56 = scmp.ne.s32.totalorder %s41, %s55
      %p57 = scmp.eq.s32.totalorder %s15, 0
      %p58 = por %p56, %p57
      %p59 = scmp.le.s32.totalorder 1, %s9
      %p60 = scmp.lt.s32.totalorder %s9, 3
      %p61 = pnand %p59, %p60
      %p62 = pneg %p61
      // Predicated region
      $region9: #{tpu_custom_call.1} parent=5 // pred_check
        _
      $region10: #{tpu_custom_call.1} parent=5 // pred_check_branch
        %64 = sbr.rel (%p61) target = $region12
      $region11: #{tpu_custom_call.1} parent=5 // pred_region
        %s65 = ssub.s32 %s9, 1
        // Predicated region
        $region13: #{tpu_custom_call.1} parent=11 // pred_check
          %p66 = pneg %p30
        $region14: #{tpu_custom_call.1} parent=11 // pred_check_branch
          %68 = sbr.rel (%p66) target = $region16
        $region15: #{tpu_custom_call.1} parent=11 // pred_region
          %s70 = ssub.s32 128, 128
          %71 = vsyncadd [#allocation3], %s70
          %s73 = sshll.u32 [#allocation2], 4
          %s74 = int_to_ptr.vmem [resolvable:$true] %s73
          %76 = dma.hbm_to_vmem [thread:$0]  %s0, 128, %s74, [#allocation3]
        $region16: #{tpu_custom_call.1} parent=11 // pred_fallthru
          _
      $region12: #{tpu_custom_call.1} parent=5 // pred_fallthru
        _
      %p77 = scmp.lt.s32.totalorder %s9, 2
      // Predicated region
      $region17: #{tpu_custom_call.1} parent=5 // pred_check
        %p78 = pneg %p77
      $region18: #{tpu_custom_call.1} parent=5 // pred_check_branch
        %80 = sbr.rel (%p78) target = $region20
      $region19: #{tpu_custom_call.1} parent=5 // pred_region
        _
      $region20: #{tpu_custom_call.1} parent=5 // pred_fallthru
        _
      %p81 = scmp.le.s32.totalorder 1, %s9
      %p82 = scmp.lt.s32.totalorder %s9, 3
      %p83 = pnand %p81, %p82
      %p84 = pneg %p83
      // Predicated region
      $region21: #{tpu_custom_call.1} parent=5 // pred_check
        _
      $region22: #{tpu_custom_call.1} parent=5 // pred_check_branch
        %86 = sbr.rel (%p83) target = $region24
      $region23: #{tpu_custom_call.1} parent=5 // pred_region
        %s87 = ssub.s32 %s9, 1
        // Predicated region
        $region25: #{tpu_custom_call.1} parent=23 // pred_check
          %p88 = pneg %p30
        $region26: #{tpu_custom_call.1} parent=23 // pred_check_branch
          %90 = sbr.rel (%p88) target = $region28
        $region27: #{tpu_custom_call.1} parent=23 // pred_region
          %91 = dma.done [#allocation3], 128
        $region28: #{tpu_custom_call.1} parent=23 // pred_fallthru
          _
        %p92 = pneg %p30
        %p93 = pneg %p27
        %p94 = pneg %p51
        %p95 = pneg %p48
        %v96 = vld [vmem:[#allocation2] sm:$0xff]
        %97 = vst [vmem:[#allocation5] sm:$0xff] %v96
        // Predicated region
        $region29: #{tpu_custom_call.1} parent=23 // pred_check
          %p98 = pneg %p48
        $region30: #{tpu_custom_call.1} parent=23 // pred_check_branch
          %100 = sbr.rel (%p98) target = $region32
        $region31: #{tpu_custom_call.1} parent=23 // pred_region
          %s102 = ssub.s32 128, 128
          %103 = vsyncadd [#allocation4], %s102
          %s105 = sshll.u32 [#allocation5], 4
          %s106 = int_to_ptr.vmem [resolvable:$true] %s105
          %108 = dma.vmem_to_hbm [thread:$0]  %s106, 128, %s1, [#allocation4]
        $region32: #{tpu_custom_call.1} parent=23 // pred_fallthru
          _
        // Predicated region
        $region33: #{tpu_custom_call.1} parent=23 // pred_check
          %p109 = pneg %p48
        $region34: #{tpu_custom_call.1} parent=23 // pred_check_branch
          %111 = sbr.rel (%p109) target = $region36
        $region35: #{tpu_custom_call.1} parent=23 // pred_region
          %112 = dma.done [#allocation4], 128
        $region36: #{tpu_custom_call.1} parent=23 // pred_fallthru
          _
      $region24: #{tpu_custom_call.1} parent=5 // pred_fallthru
        _
      %p113 = scmp.le.s32.totalorder 2, %s9
      // Predicated region
      $region37: #{tpu_custom_call.1} parent=5 // pred_check
        %p114 = pneg %p113
      $region38: #{tpu_custom_call.1} parent=5 // pred_check_branch
        %116 = sbr.rel (%p114) target = $region40
      $region39: #{tpu_custom_call.1} parent=5 // pred_region
        %s117 = ssub.s32 %s9, 2
      $region40: #{tpu_custom_call.1} parent=5 // pred_fallthru
        _
    $region6: #{tpu_custom_call.1} parent=1 // loop_footer
      %s13 = sadd.s32 1, %s9
    $region7: #{tpu_custom_call.1} parent=1 // loop_footer_branch
      %8 = sbr.rel target = $region3
    $region8: #{tpu_custom_call.1} parent=1 // loop_exit
      _
    %118 = vsyncpa [#allocation3], 1
    %s119 = scalar_lea.sflag [#allocation3], 1
    %120 = vsyncpa %s119, 1
    %121 = vsyncpa [#allocation4], 1
    %s122 = scalar_lea.sflag [#allocation4], 1
    %123 = vsyncpa %s122, 1

// kernel: _bpnet_forward_padded.1
$region0: #{_bpnet_forward_padded.1}
  #allocation0 [shape = 'u32[]', space=smem, size = 0x4, offset = 0x4, fixed_abs, tag = 'smem constant byte address 0x4 - core index']
  #allocation1 [shape = 'u32[144,128]{1,0:T(1,128)}', space=vmem, size = 0x12000, scoped, tag = 'internal scratch']
  #allocation2 [shape = 'f32[8,128]{1,0:T(8,128)}', space=vmem, size = 0x1000, scoped, tag = 'scratch operand']
  %s0 = inlined_call_operand.vmem [shape: f32[8,128], index: 0, kind: input, shape index: {}]
  %s1 = inlined_call_operand.hbm [shape: f32[128,128], index: 1, kind: input, shape index: {}]
  %s2 = inlined_call_operand.vmem [shape: f32[1,128], index: 2, kind: input, shape index: {}]
  %s3 = inlined_call_operand.hbm [shape: f32[128,128], index: 3, kind: input, shape index: {}]
  %s4 = inlined_call_operand.vmem [shape: f32[1,128], index: 4, kind: input, shape index: {}]
  %s5 = inlined_call_operand.vmem [shape: f32[8,128], index: 5, kind: output, shape index: {}]
  %s6 = sld [smem:[#allocation0]]
  $region46: #{_bpnet_forward_padded.1} parent=0
    _
  %s8 = ssub.s32 1, %s6
  %s9 = scalar_select 0, %s8, %s6
  $region1: #{_bpnet_forward_padded.1} parent=0
    #allocation3 [shape = 'u8[65536]{0}', space=vmem, size = 0x10000, scoped, tag = 'input window, operand 1, single buffered']
    #allocation4 [shape = 's32[1]{0}', space=sflag, size = 0x4, scoped, tag = 'scoped memory for _bpnet_forward_padded.1']
    #allocation5 [shape = 'u8[65536]{0}', space=vmem, size = 0x10000, scoped, tag = 'input window, operand 3, single buffered']
    #allocation6 [shape = 's32[1]{0}', space=sflag, size = 0x4, scoped, tag = 'scoped memory for _bpnet_forward_padded.1']
    %10 = vsyncpa [#allocation4], 0
    %11 = vsyncpa [#allocation6], 0
    // Predicated region
    $region2: #{_bpnet_forward_padded.1} parent=1 // pred_check
      _
    $region3: #{_bpnet_forward_padded.1} parent=1 // pred_check_branch
      %13 = sbr.rel (0) target = $region5
    $region4: #{_bpnet_forward_padded.1} parent=1 // pred_region
      _
    $region5: #{_bpnet_forward_padded.1} parent=1 // pred_fallthru
      _
    // Predicated region
    $region6: #{_bpnet_forward_padded.1} parent=1 // pred_check
      _
    $region7: #{_bpnet_forward_padded.1} parent=1 // pred_check_branch
      %15 = sbr.rel (0) target = $region9
    $region8: #{_bpnet_forward_padded.1} parent=1 // pred_region
      %s17 = ssub.s32 2048, 2048
      %18 = vsyncadd [#allocation4], %s17
      %s19 = sshll.u32 [#allocation3], 4
      %s20 = int_to_ptr.vmem [resolvable:$true] %s19
      %25 = dma.hbm_to_vmem [thread:$0]  %s1, 2048, %s20, [#allocation4], 128, 128, 8
    $region9: #{_bpnet_forward_padded.1} parent=1 // pred_fallthru
      _
    // Predicated region
    $region10: #{_bpnet_forward_padded.1} parent=1 // pred_check
      _
    $region11: #{_bpnet_forward_padded.1} parent=1 // pred_check_branch
      %27 = sbr.rel (0) target = $region13
    $region12: #{_bpnet_forward_padded.1} parent=1 // pred_region
      _
    $region13: #{_bpnet_forward_padded.1} parent=1 // pred_fallthru
      _
    // Predicated region
    $region14: #{_bpnet_forward_padded.1} parent=1 // pred_check
      _
    $region15: #{_bpnet_forward_padded.1} parent=1 // pred_check_branch
      %29 = sbr.rel (0) target = $region17
    $region16: #{_bpnet_forward_padded.1} parent=1 // pred_region
      %s31 = ssub.s32 2048, 2048
      %32 = vsyncadd [#allocation6], %s31
      %s33 = sshll.u32 [#allocation5], 4
      %s34 = int_to_ptr.vmem [resolvable:$true] %s33
      %39 = dma.hbm_to_vmem [thread:$0]  %s3, 2048, %s34, [#allocation6], 128, 128, 8
    $region17: #{_bpnet_forward_padded.1} parent=1 // pred_fallthru
      _
    // Predicated region
    $region18: #{_bpnet_forward_padded.1} parent=1 // pred_check
      _
    $region19: #{_bpnet_forward_padded.1} parent=1 // pred_check_branch
      %41 = sbr.rel (0) target = $region21
    $region20: #{_bpnet_forward_padded.1} parent=1 // pred_region
      _
    $region21: #{_bpnet_forward_padded.1} parent=1 // pred_fallthru
      _
    // Predicated region
    $region22: #{_bpnet_forward_padded.1} parent=1 // pred_check
      _
    $region23: #{_bpnet_forward_padded.1} parent=1 // pred_check_branch
      %43 = sbr.rel (0) target = $region25
    $region24: #{_bpnet_forward_padded.1} parent=1 // pred_region
      %44 = dma.done [#allocation4], 2048
    $region25: #{_bpnet_forward_padded.1} parent=1 // pred_fallthru
      _
    // Predicated region
    $region26: #{_bpnet_forward_padded.1} parent=1 // pred_check
      _
    $region27: #{_bpnet_forward_padded.1} parent=1 // pred_check_branch
      %46 = sbr.rel (0) target = $region29
    $region28: #{_bpnet_forward_padded.1} parent=1 // pred_region
      %47 = dma.done [#allocation6], 2048
    $region29: #{_bpnet_forward_padded.1} parent=1 // pred_fallthru
      _
    %p48 = scmp.eq.s32.totalorder 0, 0
    // Predicated region
    $region30: #{_bpnet_forward_padded.1} parent=1 // pred_check
      %p49 = pneg %p48
    $region31: #{_bpnet_forward_padded.1} parent=1 // pred_check_branch
      %51 = sbr.rel (%p49) target = $region33
    $region32: #{_bpnet_forward_padded.1} parent=1 // pred_region
      %52 = vst [vmem:[#allocation2] sm:$0xff] 0.0
    $region33: #{_bpnet_forward_padded.1} parent=1 // pred_fallthru
      _
    %v53 = vld [vmem:[%s0] sm:$0xff]
    %v54 = vld [vmem:[#allocation3] sm:$0xff]
    %v55 = vld [vmem:[#allocation3 + $0x8] sm:$0xff]
    %v56 = vld [vmem:[#allocation3 + $0x10] sm:$0xff]
    %v57 = vld [vmem:[#allocation3 + $0x18] sm:$0xff]
    %v58 = vld [vmem:[#allocation3 + $0x20] sm:$0xff]
    %v59 = vld [vmem:[#allocation3 + $0x28] sm:$0xff]
    %v60 = vld [vmem:[#allocation3 + $0x30] sm:$0xff]
    %v61 = vld [vmem:[#allocation3 + $0x38] sm:$0xff]
    %v62 = vld [vmem:[#allocation3 + $0x40] sm:$0xff]
    %v63 = vld [vmem:[#allocation3 + $0x48] sm:$0xff]
    %v64 = vld [vmem:[#allocation3 + $0x50] sm:$0xff]
    %v65 = vld [vmem:[#allocation3 + $0x58] sm:$0xff]
    %v66 = vld [vmem:[#allocation3 + $0x60] sm:$0xff]
    %v67 = vld [vmem:[#allocation3 + $0x68] sm:$0xff]
    %v68 = vld [vmem:[#allocation3 + $0x70] sm:$0xff]
    %v69 = vld [vmem:[#allocation3 + $0x78] sm:$0xff]
    %v70 = vld [vmem:[%s2] sm:$0x1]
    %v72 = vlaneseq
    %v73 = vshrl.u32 %v72, 7
    %v74 = vsub.s32 0, %v73
    %v75 = vrot.slane %v70, %v74
    %77 = vmatprep.subr.mxu0 0.0
    %78 = vmatpush1.msra.mxu0 %v69
    %79 = vmatprep.subr.mxu0 0.0
    %80 = vmatpush1.msra.mxu0 %v68
    %81 = vmatprep.subr.mxu0 0.0
    %82 = vmatpush1.msra.mxu0 %v67
    %83 = vmatprep.subr.mxu0 0.0
    %84 = vmatpush1.msra.mxu0 %v66
    %85 = vmatprep.subr.mxu0 0.0
    %86 = vmatpush1.msra.mxu0 %v65
    %87 = vmatprep.subr.mxu0 0.0
    %88 = vmatpush1.msra.mxu0 %v64
    %89 = vmatprep.subr.mxu0 0.0
    %90 = vmatpush1.msra.mxu0 %v63
    %91 = vmatprep.subr.mxu0 0.0
    %92 = vmatpush1.msra.mxu0 %v62
    %93 = vmatprep.subr.mxu0 0.0
    %94 = vmatpush1.msra.mxu0 %v61
    %95 = vmatprep.subr.mxu0 0.0
    %96 = vmatpush1.msra.mxu0 %v60
    %97 = vmatprep.subr.mxu0 0.0
    %98 = vmatpush1.msra.mxu0 %v59
    %99 = vmatprep.subr.mxu0 0.0
    %100 = vmatpush1.msra.mxu0 %v58
    %101 = vmatprep.subr.mxu0 0.0
    %102 = vmatpush1.msra.mxu0 %v57
    %103 = vmatprep.subr.mxu0 0.0
    %104 = vmatpush1.msra.mxu0 %v56
    %105 = vmatprep.subr.mxu0 0.0
    %106 = vmatpush1.msra.mxu0 %v55
    %107 = vmatprep.subr.mxu0 0.0
    %108 = vmatpush1.msra.mxu0 %v54
    %109 = vmatprep.subr.mxu0 0.0
    %110 = vmatpush2.msra.mxu0 0.0
    %111 = vmatprep.subr.mxu0 0.0
    %112 = vmatpush2.msra.mxu0 0.0
    %113 = vmatprep.subr.mxu0 0.0
    %114 = vmatpush2.msra.mxu0 0.0
    %115 = vmatprep.subr.mxu0 0.0
    %116 = vmatpush2.msra.mxu0 0.0
    %117 = vmatprep.subr.mxu0 0.0
    %118 = vmatpush2.msra.mxu0 0.0
    %119 = vmatprep.subr.mxu0 0.0
    %120 = vmatpush2.msra.mxu0 0.0
    %121 = vmatprep.subr.mxu0 0.0
    %122 = vmatpush2.msra.mxu0 0.0
    %123 = vmatprep.subr.mxu0 0.0
    %124 = vmatpush2.msra.mxu0 0.0
    %125 = vmatprep.subr.mxu0 0.0
    %126 = vmatpush2.msra.mxu0 0.0
    %127 = vmatprep.subr.mxu0 0.0
    %128 = vmatpush2.msra.mxu0 0.0
    %129 = vmatprep.subr.mxu0 0.0
    %130 = vmatpush2.msra.mxu0 0.0
    %131 = vmatprep.subr.mxu0 0.0
    %132 = vmatpush2.msra.mxu0 0.0
    %133 = vmatprep.subr.mxu0 0.0
    %134 = vmatpush2.msra.mxu0 0.0
    %135 = vmatprep.subr.mxu0 0.0
    %136 = vmatpush2.msra.mxu0 0.0
    %137 = vmatprep.subr.mxu0 0.0
    %138 = vmatpush2.msra.mxu0 0.0
    %139 = vmatprep.subr.mxu0 0.0
    %140 = vmatpush2.msra.mxu0 0.0
    %141 = vmatprep.mubr.f32.mxu0 0.0
    %142 = vmatmul.mubr.f32.gmra.mxu0 %v53
    %v143 = vpop.f32.mrf.mxu0
    %v144 = vadd.f32 %v75, %v143
    %v145 = vpop.f32.mrf.mxu0
    %146 = vdwg.mxu0
    %v147 = vmax.f32 %v144, 0.0
    %v148 = vld [vmem:[#allocation2] sm:$0xff]
    %v149 = vld [vmem:[#allocation5] sm:$0xff]
    %v150 = vld [vmem:[#allocation5 + $0x8] sm:$0xff]
    %v151 = vld [vmem:[#allocation5 + $0x10] sm:$0xff]
    %v152 = vld [vmem:[#allocation5 + $0x18] sm:$0xff]
    %v153 = vld [vmem:[#allocation5 + $0x20] sm:$0xff]
    %v154 = vld [vmem:[#allocation5 + $0x28] sm:$0xff]
    %v155 = vld [vmem:[#allocation5 + $0x30] sm:$0xff]
    %v156 = vld [vmem:[#allocation5 + $0x38] sm:$0xff]
    %v157 = vld [vmem:[#allocation5 + $0x40] sm:$0xff]
    %v158 = vld [vmem:[#allocation5 + $0x48] sm:$0xff]
    %v159 = vld [vmem:[#allocation5 + $0x50] sm:$0xff]
    %v160 = vld [vmem:[#allocation5 + $0x58] sm:$0xff]
    %v161 = vld [vmem:[#allocation5 + $0x60] sm:$0xff]
    %v162 = vld [vmem:[#allocation5 + $0x68] sm:$0xff]
    %v163 = vld [vmem:[#allocation5 + $0x70] sm:$0xff]
    %v164 = vld [vmem:[#allocation5 + $0x78] sm:$0xff]
    %165 = vmatprep.subr.mxu0 0.0
    %166 = vmatpush1.msra.mxu0 %v164
    %167 = vmatprep.subr.mxu0 0.0
    %168 = vmatpush1.msra.mxu0 %v163
    %169 = vmatprep.subr.mxu0 0.0
    %170 = vmatpush1.msra.mxu0 %v162
    %171 = vmatprep.subr.mxu0 0.0
    %172 = vmatpush1.msra.mxu0 %v161
    %173 = vmatprep.subr.mxu0 0.0
    %174 = vmatpush1.msra.mxu0 %v160
    %175 = vmatprep.subr.mxu0 0.0
    %176 = vmatpush1.msra.mxu0 %v159
    %177 = vmatprep.subr.mxu0 0.0
    %178 = vmatpush1.msra.mxu0 %v158
    %179 = vmatprep.subr.mxu0 0.0
    %180 = vmatpush1.msra.mxu0 %v157
    %181 = vmatprep.subr.mxu0 0.0
    %182 = vmatpush1.msra.mxu0 %v156
    %183 = vmatprep.subr.mxu0 0.0
    %184 = vmatpush1.msra.mxu0 %v155
    %185 = vmatprep.subr.mxu0 0.0
    %186 = vmatpush1.msra.mxu0 %v154
    %187 = vmatprep.subr.mxu0 0.0
    %188 = vmatpush1.msra.mxu0 %v153
    %189 = vmatprep.subr.mxu0 0.0
    %190 = vmatpush1.msra.mxu0 %v152
    %191 = vmatprep.subr.mxu0 0.0
    %192 = vmatpush1.msra.mxu0 %v151
    %193 = vmatprep.subr.mxu0 0.0
    %194 = vmatpush1.msra.mxu0 %v150
    %195 = vmatprep.subr.mxu0 0.0
    %196 = vmatpush1.msra.mxu0 %v149
    %197 = vmatprep.subr.mxu0 0.0
    %198 = vmatpush2.msra.mxu0 0.0
    %199 = vmatprep.subr.mxu0 0.0
    %200 = vmatpush2.msra.mxu0 0.0
    %201 = vmatprep.subr.mxu0 0.0
    %202 = vmatpush2.msra.mxu0 0.0
    %203 = vmatprep.subr.mxu0 0.0
    %204 = vmatpush2.msra.mxu0 0.0
    %205 = vmatprep.subr.mxu0 0.0
    %206 = vmatpush2.msra.mxu0 0.0
    %207 = vmatprep.subr.mxu0 0.0
    %208 = vmatpush2.msra.mxu0 0.0
    %209 = vmatprep.subr.mxu0 0.0
    %210 = vmatpush2.msra.mxu0 0.0
    %211 = vmatprep.subr.mxu0 0.0
    %212 = vmatpush2.msra.mxu0 0.0
    %213 = vmatprep.subr.mxu0 0.0
    %214 = vmatpush2.msra.mxu0 0.0
    %215 = vmatprep.subr.mxu0 0.0
    %216 = vmatpush2.msra.mxu0 0.0
    %217 = vmatprep.subr.mxu0 0.0
    %218 = vmatpush2.msra.mxu0 0.0
    %219 = vmatprep.subr.mxu0 0.0
    %220 = vmatpush2.msra.mxu0 0.0
    %221 = vmatprep.subr.mxu0 0.0
    %222 = vmatpush2.msra.mxu0 0.0
    %223 = vmatprep.subr.mxu0 0.0
    %224 = vmatpush2.msra.mxu0 0.0
    %225 = vmatprep.subr.mxu0 0.0
    %226 = vmatpush2.msra.mxu0 0.0
    %227 = vmatprep.subr.mxu0 0.0
    %228 = vmatpush2.msra.mxu0 0.0
    %229 = vmatprep.mubr.f32.mxu0 0.0
    %230 = vmatmul.mubr.f32.gmra.mxu0 %v147
    %v231 = vpop.f32.mrf.mxu0
    %v232 = vadd.f32 0.0, %v231
    %v233 = vpop.f32.mrf.mxu0
    %234 = vdwg.mxu0
    %v235 = vadd.f32 %v148, %v232
    %236 = vst [vmem:[#allocation2] sm:$0xff] %v235
    // Predicated region
    $region34: #{_bpnet_forward_padded.1} parent=1 // pred_check
      %p237 = pneg %p48
    $region35: #{_bpnet_forward_padded.1} parent=1 // pred_check_branch
      %239 = sbr.rel (%p237) target = $region37
    $region36: #{_bpnet_forward_padded.1} parent=1 // pred_region
      %v240 = vld [vmem:[#allocation2] sm:$0xff]
      %v241 = vld [vmem:[%s4] sm:$0x1]
      %v243 = vlaneseq
      %v244 = vshrl.u32 %v243, 7
      %v245 = vsub.s32 0, %v244
      %v246 = vrot.slane %v241, %v245
      %v248 = vadd.f32 %v240, %v246
      %249 = vst [vmem:[%s5] sm:$0xff] %v248
    $region37: #{_bpnet_forward_padded.1} parent=1 // pred_fallthru
      _
    // Predicated region
    $region38: #{_bpnet_forward_padded.1} parent=1 // pred_check
      _
    $region39: #{_bpnet_forward_padded.1} parent=1 // pred_check_branch
      %251 = sbr.rel (0) target = $region41
    $region40: #{_bpnet_forward_padded.1} parent=1 // pred_region
      _
    $region41: #{_bpnet_forward_padded.1} parent=1 // pred_fallthru
      _
    // Predicated region
    $region42: #{_bpnet_forward_padded.1} parent=1 // pred_check
      _
    $region43: #{_bpnet_forward_padded.1} parent=1 // pred_check_branch
      %253 = sbr.rel (0) target = $region45
    $region44: #{_bpnet_forward_padded.1} parent=1 // pred_region
      _
    $region45: #{_bpnet_forward_padded.1} parent=1 // pred_fallthru
      _
    %254 = vsyncpa [#allocation4], 1
    %255 = vsyncpa [#allocation6], 1

</llo_original>
